<compile_context>
chip_gen: v7x
topology: tpu7x:2x2x1
jax: 0.10.0
libtpu: 0.0.40
codegen_flags: <defaults>
</compile_context>

<pallas_src>
import math
from typing import NamedTuple

import jax
import jax.numpy as jnp
from jax import lax
from jax.experimental import pallas as pl
from jax.experimental.pallas import tpu as pltpu


def _round_up(x: int, m: int) -> int:
    return ((x + m - 1) // m) * m


def _pick_divisor_tile(padded: int, unit: int, cap: int) -> int:
    """Largest multiple of `unit` that divides `padded` and is <= cap.

    `padded` is already a multiple of `unit`, so padding waste is capped at
    one `unit` (fixes the old round_up(dim, tile) near-doubling behavior).
    """
    best = unit
    t = unit
    limit = min(padded, cap)
    while t <= limit:
        if padded % t == 0:
            best = t
        t += unit
    return best


def _vmem_budget_bytes() -> int:
    """Per-generation VMEM budget with headroom (v5e/v6e 128 MiB, v7x 64 MiB)."""
    try:
        cap = int(pltpu.get_tpu_info().vmem_capacity_bytes)
    except Exception:
        cap = 64 * 1024 * 1024
    return int(min(100 * 1024 * 1024, cap * 3 // 4))


# ---------------------------------------------------------------------------
# Parameter packing (one-time, outside the per-step path)
# ---------------------------------------------------------------------------


class PackedRNNCellParams(NamedTuple):
    wx: jax.Array        # (D_pad, H_pad)  = W_h[:, :D].T zero-padded
    wh: jax.Array        # (H_pad, H_pad)  = W_h[:, D:].T zero-padded
    b: jax.Array         # (1, H_pad)      zero-padded bias
    input_dim: int
    hidden_dim: int


def pack_rnn_cell_params(W_h, b_h, input_dim: int, hidden_dim: int, dtype=None):
    """Split the nn.Linear weight into input/recurrent halves, transpose, and
    zero-pad so the kernels never pay for relayout. Pass dtype=jnp.bfloat16 to
    halve weight HBM traffic (accumulation stays f32)."""
    K = input_dim + hidden_dim
    H = hidden_dim
    assert W_h.shape == (H, K)
    assert b_h.shape == (H,)
    dtype = dtype or W_h.dtype

    d_pad = _round_up(input_dim, 8)     # sublane-aligned contraction dim
    h_pad = _round_up(H, 128)           # lane-dense output dim

    wx = jnp.zeros((d_pad, h_pad), dtype=dtype)
    wx = wx.at[:input_dim, :H].set(W_h[:, :input_dim].T.astype(dtype))
    wh = jnp.zeros((h_pad, h_pad), dtype=dtype)
    wh = wh.at[:H, :H].set(W_h[:, input_dim:].T.astype(dtype))
    b = jnp.zeros((1, h_pad), dtype=dtype).at[0, :H].set(b_h.astype(dtype))
    return PackedRNNCellParams(wx, wh, b, input_dim, hidden_dim)


# ---------------------------------------------------------------------------
# Single-step kernel (matches the nn.Module forward)
# ---------------------------------------------------------------------------


def _rnn_step_kernel(x_ref, h_ref, wx_ref, wh_ref, b_ref, out_ref):
    # x_ref: (TB, D_pad)  h_ref: (TB, H_pad)
    # wx_ref: (D_pad, TN) wh_ref: (H_pad, TN) b_ref: (1, TN)  out_ref: (TB, TN)
    pre = (
        jnp.dot(x_ref[...], wx_ref[...], preferred_element_type=jnp.float32)
        + jnp.dot(h_ref[...], wh_ref[...], preferred_element_type=jnp.float32)
        + b_ref[...].astype(jnp.float32)
    )
    out_ref[...] = jnp.tanh(pre).astype(out_ref.dtype)


def rnn_cell_forward(x_t, h_t_minus_1, params: PackedRNNCellParams):
    """Single RNN step: h_t = tanh(cat([x_t, h_{t-1}]) @ W.T + b)."""
    B, D_in = x_t.shape
    H = params.hidden_dim
    assert D_in == params.input_dim and h_t_minus_1.shape == (B, H)

    d_pad, h_pad = params.wx.shape[0], params.wx.shape[1]
    budget = _vmem_budget_bytes()
    itemsize = jnp.dtype(params.wx.dtype).itemsize

    b_pad = _round_up(B, 8)
    TB = _pick_divisor_tile(b_pad, 8, 256)

    # Resident W when it fits the budget (TN == h_pad); otherwise tile N.
    col_bytes = 2 * (d_pad + h_pad + 1) * itemsize      # double-buffered tiles
    tn_cap = max(128, (int(budget * 0.6) // max(col_bytes, 1)) // 128 * 128)
    TN = _pick_divisor_tile(h_pad, 128, tn_cap)

    # Small activation-only pads (the big weight was packed once, offline).
    xp = jnp.pad(x_t, ((0, b_pad - B), (0, d_pad - D_in)))
    hp = jnp.pad(h_t_minus_1, ((0, b_pad - B), (0, h_pad - H)))

    grid = (b_pad // TB, h_pad // TN)

    out_padded = pl.pallas_call(
        _rnn_step_kernel,
        out_shape=jax.ShapeDtypeStruct((b_pad, h_pad), x_t.dtype),
        grid_spec=pltpu.PrefetchScalarGridSpec(
            num_scalar_prefetch=0,
            grid=grid,
            in_specs=[
                pl.BlockSpec((TB, d_pad), lambda i, j: (i, 0)),     # x tile
                pl.BlockSpec((TB, h_pad), lambda i, j: (i, 0)),     # h tile
                pl.BlockSpec((d_pad, TN), lambda i, j: (0, j)),     # Wx (resident over i)
                pl.BlockSpec((h_pad, TN), lambda i, j: (0, j)),     # Wh (resident over i)
                pl.BlockSpec((1, TN), lambda i, j: (0, j)),         # bias
            ],
            out_specs=pl.BlockSpec((TB, TN), lambda i, j: (i, j)),
        ),
        compiler_params=pltpu.CompilerParams(
            dimension_semantics=("parallel", "parallel"),
            vmem_limit_bytes=budget,
        ),
    )(xp, hp, params.wx, params.wh, params.b)

    return out_padded[:B, :H]


# ---------------------------------------------------------------------------
# Fused sequence kernel: whole recurrence in one pallas_call
# (weights resident in VMEM across all T steps, h carried in VMEM scratch)
# ---------------------------------------------------------------------------


def _rnn_seq_kernel(x_ref, h0_ref, wx_ref, wh_ref, b_ref, out_ref, h_carry):
    t = pl.program_id(1)

    @pl.when(t == 0)
    def _():
        h_carry[...] = h0_ref[...].astype(jnp.float32)

    pre = (
        jnp.dot(x_ref[...], wx_ref[...], preferred_element_type=jnp.float32)
        + jnp.dot(h_carry[...].astype(wh_ref.dtype), wh_ref[...],
                  preferred_element_type=jnp.float32)
        + b_ref[...].astype(jnp.float32)
    )
    h_new = jnp.tanh(pre)
    h_carry[...] = h_new
    out_ref[...] = h_new.astype(out_ref.dtype)


def rnn_sequence_forward(x_seq, h_0, params: PackedRNNCellParams):
    """Run the RNN cell over a sequence: x_seq (T, B, D_in) -> (T, B, H)."""
    T, B, D_in = x_seq.shape
    H = params.hidden_dim
    assert D_in == params.input_dim and h_0.shape == (B, H)

    d_pad, h_pad = params.wx.shape[0], params.wx.shape[1]
    budget = _vmem_budget_bytes()

    b_pad = _round_up(B, 8)
    TB = _pick_divisor_tile(b_pad, 8, 256)

    xp = jnp.pad(x_seq, ((0, 0), (0, b_pad - B), (0, d_pad - D_in)))
    hp = jnp.pad(h_0, ((0, b_pad - B), (0, h_pad - H)))

    grid = (b_pad // TB, T)  # batch tiles parallel (megacore), time sequential

    out_padded = pl.pallas_call(
        _rnn_seq_kernel,
        out_shape=jax.ShapeDtypeStruct((T, b_pad, h_pad), x_seq.dtype),
        grid_spec=pltpu.PrefetchScalarGridSpec(
            num_scalar_prefetch=0,
            grid=grid,
            in_specs=[
                pl.BlockSpec((None, TB, d_pad), lambda i, t: (t, i, 0)),  # x_t tile
                pl.BlockSpec((TB, h_pad), lambda i, t: (i, 0)),           # h0 tile
                pl.BlockSpec((d_pad, h_pad), lambda i, t: (0, 0)),        # Wx resident
                pl.BlockSpec((h_pad, h_pad), lambda i, t: (0, 0)),        # Wh resident
                pl.BlockSpec((1, h_pad), lambda i, t: (0, 0)),            # bias resident
            ],
            out_specs=pl.BlockSpec((None, TB, h_pad), lambda i, t: (t, i, 0)),
            scratch_shapes=[pltpu.VMEM((TB, h_pad), jnp.float32)],        # h carry
        ),
        compiler_params=pltpu.CompilerParams(
            dimension_semantics=("parallel", "arbitrary"),
            vmem_limit_bytes=budget,
        ),
    )(xp, hp, params.wx, params.wh, params.b)

    return out_padded[:, :B, :H]


# ---------------------------------------------------------------------------
# Initialization + reference + demo
# ---------------------------------------------------------------------------


def init_rnn_cell_params(key, input_dim, hidden_dim, dtype=jnp.float32):
    """Matches nn.Linear's default U(-1/sqrt(fan_in), 1/sqrt(fan_in))."""
    fan_in = input_dim + hidden_dim
    bound = 1.0 / math.sqrt(fan_in)
    k_w, k_b = jax.random.split(key)
    W_h = jax.random.uniform(
        k_w, (hidden_dim, fan_in), dtype=dtype, minval=-bound, maxval=bound
    )
    b_h = jax.random.uniform(
        k_b, (hidden_dim,), dtype=dtype, minval=-bound, maxval=bound
    )
    return W_h, b_h


def _reference_step(x_t, h_prev, W_h, b_h):
    combined = jnp.concatenate([x_t, h_prev], axis=1)
    return jnp.tanh(
        jnp.dot(combined, W_h.T, precision=lax.Precision.HIGHEST) + b_h
    )


if __name__ == "__main__":
    key = jax.random.PRNGKey(0)
    k_x, k_h, k_p, k_seq = jax.random.split(key, 4)

    batch = 2
    input_dim = 4
    hidden_dim = 32
    seq_len = 8

    x_t = jax.random.normal(k_x, (batch, input_dim), dtype=jnp.float32)
    h_prev = jax.random.normal(k_h, (batch, hidden_dim), dtype=jnp.float32)
    x_seq = jax.random.normal(k_seq, (seq_len, batch, input_dim), dtype=jnp.float32)
    W_h, b_h = init_rnn_cell_params(k_p, input_dim, hidden_dim)

    # One-time parameter packing (split/transpose/pad) — not in the step path.
    packed = pack_rnn_cell_params(W_h, b_h, input_dim, hidden_dim)

    # --- single step (the nn.Module forward) ---
    h_t = jax.block_until_ready(rnn_cell_forward(x_t, h_prev, packed))
    h_ref = _reference_step(x_t, h_prev, W_h, b_h)
    assert h_t.shape == (batch, hidden_dim)
    assert jnp.allclose(h_t, h_ref, atol=1e-5, rtol=1e-5), "step mismatch vs reference"

    # --- fused sequence (time loop inside one pallas_call, W resident) ---
    h_seq = jax.block_until_ready(rnn_sequence_forward(x_seq, h_prev, packed))
    h = h_prev
    refs = []
    for t in range(seq_len):
        h = _reference_step(x_seq[t], h, W_h, b_h)
        refs.append(h)
    h_seq_ref = jnp.stack(refs)
    assert h_seq.shape == (seq_len, batch, hidden_dim)
    assert jnp.allclose(h_seq, h_seq_ref, atol=1e-5, rtol=1e-5), \
        "sequence mismatch vs reference"

    print("KERNEL_OK")
</pallas_src>

<mosaic_0001>
module attributes {stable_mosaic.version = 11 : i64} {
  func.func @_rnn_step_kernel(%arg0: i32, %arg1: i32, %arg2: memref<8x8xf32, #tpu.memory_space<vmem>>, %arg3: memref<8x128xf32, #tpu.memory_space<vmem>>, %arg4: memref<8x128xf32, #tpu.memory_space<vmem>>, %arg5: memref<128x128xf32, #tpu.memory_space<vmem>>, %arg6: memref<1x128xf32, #tpu.memory_space<vmem>>, %arg7: memref<8x128xf32, #tpu.memory_space<vmem>>) attributes {dimension_semantics = [#tpu.dimension_semantics<parallel>, #tpu.dimension_semantics<parallel>], iteration_bounds = array<i64: 1, 1>, scalar_prefetch = 0 : i64, scratch_operands = 0 : i64, tpu.core_type = #tpu.core_type<tc>, window_params = [{transform_indices = @transform_0, window_bounds = array<i64: 8, 8>}, {transform_indices = @transform_1, window_bounds = array<i64: 8, 128>}, {transform_indices = @transform_2, window_bounds = array<i64: 8, 128>}, {transform_indices = @transform_3, window_bounds = array<i64: 128, 128>}, {transform_indices = @transform_4, window_bounds = array<i64: 1, 128>}, {transform_indices = @transform_5, window_bounds = array<i64: 8, 128>}]} {
    %c0 = arith.constant 0 : index
    %c0_0 = arith.constant 0 : index
    %0 = vector.load %arg2[%c0, %c0_0] : memref<8x8xf32, #tpu.memory_space<vmem>>, vector<8x8xf32>
    %c0_1 = arith.constant 0 : index
    %c0_2 = arith.constant 0 : index
    %1 = vector.load %arg4[%c0_1, %c0_2] : memref<8x128xf32, #tpu.memory_space<vmem>>, vector<8x128xf32>
    %cst = arith.constant dense<0.000000e+00> : vector<8x128xf32>
    %2 = tpu.matmul %0, %1, %cst {dimension_numbers = #tpu.dot_dimension_numbers<[1], [0], [0], [1], [0, 0, 1, 1], [], []>} : vector<8x8xf32>, vector<8x128xf32>, vector<8x128xf32> -> vector<8x128xf32>
    %c0_3 = arith.constant 0 : index
    %c0_4 = arith.constant 0 : index
    %3 = vector.load %arg3[%c0_3, %c0_4] : memref<8x128xf32, #tpu.memory_space<vmem>>, vector<8x128xf32>
    %c0_5 = arith.constant 0 : index
    %c0_6 = arith.constant 0 : index
    %4 = vector.load %arg5[%c0_5, %c0_6] : memref<128x128xf32, #tpu.memory_space<vmem>>, vector<128x128xf32>
    %cst_7 = arith.constant dense<0.000000e+00> : vector<8x128xf32>
    %5 = tpu.matmul %3, %4, %cst_7 {dimension_numbers = #tpu.dot_dimension_numbers<[1], [0], [0], [1], [0, 0, 1, 1], [], []>} : vector<8x128xf32>, vector<128x128xf32>, vector<8x128xf32> -> vector<8x128xf32>
    %6 = arith.addf %2, %5 : vector<8x128xf32>
    %c0_8 = arith.constant 0 : index
    %c0_9 = arith.constant 0 : index
    %7 = vector.load %arg6[%c0_8, %c0_9] : memref<1x128xf32, #tpu.memory_space<vmem>>, vector<1x128xf32>
    %8 = vector.broadcast %7 : vector<1x128xf32> to vector<8x128xf32>
    %9 = arith.addf %6, %8 : vector<8x128xf32>
    %10 = math.tanh %9 : vector<8x128xf32>
    %c0_10 = arith.constant 0 : index
    %c0_11 = arith.constant 0 : index
    %11 = vector.load %arg7[%c0_10, %c0_11] : memref<8x128xf32, #tpu.memory_space<vmem>>, vector<8x128xf32>
    tpu.vector_store %arg7[%c0_10, %c0_11], %10 {strides = array<i32>} : memref<8x128xf32, #tpu.memory_space<vmem>>, vector<8x128xf32>,
    return
  }
  func.func @transform_0(%arg0: i32, %arg1: i32) -> (i32, i32) {
    %c0_i32 = arith.constant 0 : i32
    %c0_i32_0 = arith.constant 0 : i32
    return %arg0, %c0_i32 : i32, i32
  }
  func.func @transform_1(%arg0: i32, %arg1: i32) -> (i32, i32) {
    %c0_i32 = arith.constant 0 : i32
    %c0_i32_0 = arith.constant 0 : i32
    return %arg0, %c0_i32 : i32, i32
  }
  func.func @transform_2(%arg0: i32, %arg1: i32) -> (i32, i32) {
    %c0_i32 = arith.constant 0 : i32
    %c0_i32_0 = arith.constant 0 : i32
    return %c0_i32, %arg1 : i32, i32
  }
  func.func @transform_3(%arg0: i32, %arg1: i32) -> (i32, i32) {
    %c0_i32 = arith.constant 0 : i32
    %c0_i32_0 = arith.constant 0 : i32
    return %c0_i32, %arg1 : i32, i32
  }
  func.func @transform_4(%arg0: i32, %arg1: i32) -> (i32, i32) {
    %c0_i32 = arith.constant 0 : i32
    %c0_i32_0 = arith.constant 0 : i32
    return %c0_i32, %arg1 : i32, i32
  }
  func.func @transform_5(%arg0: i32, %arg1: i32) -> (i32, i32) {
    %c0_i32 = arith.constant 0 : i32
    return %arg0, %arg1 : i32, i32
  }
}

</mosaic_0001>

<llo_original>
// kernel: tpu_custom_call.1
$region0: #{tpu_custom_call.1}
  #allocation0 [shape = 'u32[]', space=smem, size = 0x4, offset = 0x4, fixed_abs, tag = 'smem constant byte address 0x4 - core index']
  #allocation1 [shape = 'u32[144,128]{1,0:T(1,128)}', space=vmem, size = 0x12000, scoped, tag = 'internal scratch']
  %s0 = inlined_call_operand.hbm [shape: f32[8,8], index: 0, kind: input, shape index: {}]
  %s1 = inlined_call_operand.hbm [shape: f32[8,128], index: 1, kind: input, shape index: {}]
  %s2 = inlined_call_operand.hbm [shape: f32[8,128], index: 2, kind: input, shape index: {}]
  %s3 = inlined_call_operand.hbm [shape: f32[128,128], index: 3, kind: input, shape index: {}]
  %s4 = inlined_call_operand.vmem [shape: f32[1,128], index: 4, kind: input, shape index: {}]
  %s5 = inlined_call_operand.hbm [shape: f32[8,128], index: 5, kind: output, shape index: {}]
  %s6 = sld [smem:[#allocation0]]
  $region46: #{tpu_custom_call.1} parent=0
    _
  %s8 = ssub.s32 1, %s6
  %s9 = scalar_select 0, %s8, %s6
  $region1: #{tpu_custom_call.1} parent=0
    #allocation2 [shape = 'u8[4096]{0}', space=vmem, size = 0x1000, scoped, tag = 'input window, operand 0, single buffered']
    #allocation3 [shape = 's32[1]{0}', space=sflag, size = 0x4, scoped, tag = 'scoped memory for tpu_custom_call.1']
    #allocation4 [shape = 's32[1]{0}', space=sflag, size = 0x4, scoped, tag = 'scoped memory for tpu_custom_call.1']
    #allocation5 [shape = 'u8[4096]{0}', space=vmem, size = 0x1000, scoped, tag = 'input window, operand 1, single buffered']
    #allocation6 [shape = 's32[1]{0}', space=sflag, size = 0x4, scoped, tag = 'scoped memory for tpu_custom_call.1']
    #allocation7 [shape = 'u8[4096]{0}', space=vmem, size = 0x1000, scoped, tag = 'input window, operand 2, single buffered']
    #allocation8 [shape = 'u8[65536]{0}', space=vmem, size = 0x10000, scoped, tag = 'input window, operand 3, single buffered']
    #allocation9 [shape = 's32[1]{0}', space=sflag, size = 0x4, scoped, tag = 'scoped memory for tpu_custom_call.1']
    #allocation10 [shape = 'u8[4096]{0}', space=vmem, size = 0x1000, scoped, tag = 'output window, operand 0, single buffered']
    %10 = vsyncpa [#allocation3], 0
    %11 = vsyncpa [#allocation6], 0
    %12 = vsyncpa [#allocation9], 0
    %13 = vsyncpa [#allocation4], 0
    // Predicated region
    $region2: #{tpu_custom_call.1} parent=1 // pred_check
      _
    $region3: #{tpu_custom_call.1} parent=1 // pred_check_branch
      %15 = sbr.rel (0) target = $region5
    $region4: #{tpu_custom_call.1} parent=1 // pred_region
      %s17 = ssub.s32 128, 128
      %18 = vsyncadd [#allocation3], %s17
      %s20 = sshll.u32 [#allocation2], 4
      %s21 = int_to_ptr.vmem [resolvable:$true] %s20
      %23 = dma.hbm_to_vmem [thread:$0]  %s0, 128, %s21, [#allocation3]
    $region5: #{tpu_custom_call.1} parent=1 // pred_fallthru
      _
    // Predicated region
    $region6: #{tpu_custom_call.1} parent=1 // pred_check
      _
    $region7: #{tpu_custom_call.1} parent=1 // pred_check_branch
      %25 = sbr.rel (0) target = $region9
    $region8: #{tpu_custom_call.1} parent=1 // pred_region
      %s27 = ssub.s32 128, 128
      %28 = vsyncadd [#allocation6], %s27
      %s30 = sshll.u32 [#allocation5], 4
      %s31 = int_to_ptr.vmem [resolvable:$true] %s30
      %33 = dma.hbm_to_vmem [thread:$0]  %s1, 128, %s31, [#allocation6]
    $region9: #{tpu_custom_call.1} parent=1 // pred_fallthru
      _
    // Predicated region
    $region10: #{tpu_custom_call.1} parent=1 // pred_check
      _
    $region11: #{tpu_custom_call.1} parent=1 // pred_check_branch
      %35 = sbr.rel (0) target = $region13
    $region12: #{tpu_custom_call.1} parent=1 // pred_region
      %s37 = ssub.s32 128, 128
      %38 = vsyncadd [#allocation6], %s37
      %s40 = sshll.u32 [#allocation7], 4
      %s41 = int_to_ptr.vmem [resolvable:$true] %s40
      %43 = dma.hbm_to_vmem [thread:$0]  %s2, 128, %s41, [#allocation6]
    $region13: #{tpu_custom_call.1} parent=1 // pred_fallthru
      _
    // Predicated region
    $region14: #{tpu_custom_call.1} parent=1 // pred_check
      _
    $region15: #{tpu_custom_call.1} parent=1 // pred_check_branch
      %45 = sbr.rel (0) target = $region17
    $region16: #{tpu_custom_call.1} parent=1 // pred_region
      %s47 = ssub.s32 2048, 2048
      %48 = vsyncadd [#allocation9], %s47
      %s49 = sshll.u32 [#allocation8], 4
      %s50 = int_to_ptr.vmem [resolvable:$true] %s49
      %55 = dma.hbm_to_vmem [thread:$0]  %s3, 2048, %s50, [#allocation9], 128, 128, 8
    $region17: #{tpu_custom_call.1} parent=1 // pred_fallthru
      _
    // Predicated region
    $region18: #{tpu_custom_call.1} parent=1 // pred_check
      _
    $region19: #{tpu_custom_call.1} parent=1 // pred_check_branch
      %57 = sbr.rel (0) target = $region21
    $region20: #{tpu_custom_call.1} parent=1 // pred_region
      _
    $region21: #{tpu_custom_call.1} parent=1 // pred_fallthru
      _
    // Predicated region
    $region22: #{tpu_custom_call.1} parent=1 // pred_check
      _
    $region23: #{tpu_custom_call.1} parent=1 // pred_check_branch
      %59 = sbr.rel (0) target = $region25
    $region24: #{tpu_custom_call.1} parent=1 // pred_region
      %60 = dma.done [#allocation3], 128
    $region25: #{tpu_custom_call.1} parent=1 // pred_fallthru
      _
    // Predicated region
    $region26: #{tpu_custom_call.1} parent=1 // pred_check
      _
    $region27: #{tpu_custom_call.1} parent=1 // pred_check_branch
      %62 = sbr.rel (0) target = $region29
    $region28: #{tpu_custom_call.1} parent=1 // pred_region
      %63 = dma.done [#allocation6], 128
    $region29: #{tpu_custom_call.1} parent=1 // pred_fallthru
      _
    // Predicated region
    $region30: #{tpu_custom_call.1} parent=1 // pred_check
      _
    $region31: #{tpu_custom_call.1} parent=1 // pred_check_branch
      %65 = sbr.rel (0) target = $region33
    $region32: #{tpu_custom_call.1} parent=1 // pred_region
      %66 = dma.done [#allocation6], 128
    $region33: #{tpu_custom_call.1} parent=1 // pred_fallthru
      _
    // Predicated region
    $region34: #{tpu_custom_call.1} parent=1 // pred_check
      _
    $region35: #{tpu_custom_call.1} parent=1 // pred_check_branch
      %68 = sbr.rel (0) target = $region37
    $region36: #{tpu_custom_call.1} parent=1 // pred_region
      %69 = dma.done [#allocation9], 2048
    $region37: #{tpu_custom_call.1} parent=1 // pred_fallthru
      _
    %v70 = vld [vmem:[#allocation2] sm:$0xff]
    %v71 = vld [vmem:[#allocation7] sm:$0xff]
    %v72 = vld [vmem:[#allocation5] sm:$0xff]
    %v73 = vld [vmem:[#allocation8] sm:$0xff]
    %v74 = vld [vmem:[#allocation8 + $0x8] sm:$0xff]
    %v75 = vld [vmem:[#allocation8 + $0x10] sm:$0xff]
    %v76 = vld [vmem:[#allocation8 + $0x18] sm:$0xff]
    %v77 = vld [vmem:[#allocation8 + $0x20] sm:$0xff]
    %v78 = vld [vmem:[#allocation8 + $0x28] sm:$0xff]
    %v79 = vld [vmem:[#allocation8 + $0x30] sm:$0xff]
    %v80 = vld [vmem:[#allocation8 + $0x38] sm:$0xff]
    %v81 = vld [vmem:[#allocation8 + $0x40] sm:$0xff]
    %v82 = vld [vmem:[#allocation8 + $0x48] sm:$0xff]
    %v83 = vld [vmem:[#allocation8 + $0x50] sm:$0xff]
    %v84 = vld [vmem:[#allocation8 + $0x58] sm:$0xff]
    %v85 = vld [vmem:[#allocation8 + $0x60] sm:$0xff]
    %v86 = vld [vmem:[#allocation8 + $0x68] sm:$0xff]
    %v87 = vld [vmem:[#allocation8 + $0x70] sm:$0xff]
    %v88 = vld [vmem:[#allocation8 + $0x78] sm:$0xff]
    %89 = vmatprep.subr.mxu0 0.0
    %90 = vmatpush1.msra.mxu0 %v73
    %91 = vmatprep.subr.mxu0 0.0
    %92 = vmatpush1.msra.mxu0 %v74
    %93 = vmatprep.subr.mxu0 0.0
    %94 = vmatpush1.msra.mxu0 %v75
    %95 = vmatprep.subr.mxu0 0.0
    %96 = vmatpush1.msra.mxu0 %v76
    %97 = vmatprep.subr.mxu0 0.0
    %98 = vmatpush1.msra.mxu0 %v77
    %99 = vmatprep.subr.mxu0 0.0
    %100 = vmatpush1.msra.mxu0 %v78
    %101 = vmatprep.subr.mxu0 0.0
    %102 = vmatpush1.msra.mxu0 %v79
    %103 = vmatprep.subr.mxu0 0.0
    %104 = vmatpush1.msra.mxu0 %v80
    %105 = vmatprep.subr.mxu0 0.0
    %106 = vmatpush1.msra.mxu0 %v81
    %107 = vmatprep.subr.mxu0 0.0
    %108 = vmatpush1.msra.mxu0 %v82
    %109 = vmatprep.subr.mxu0 0.0
    %110 = vmatpush1.msra.mxu0 %v83
    %111 = vmatprep.subr.mxu0 0.0
    %112 = vmatpush1.msra.mxu0 %v84
    %113 = vmatprep.subr.mxu0 0.0
    %114 = vmatpush1.msra.mxu0 %v85
    %115 = vmatprep.subr.mxu0 0.0
    %116 = vmatpush1.msra.mxu0 %v86
    %117 = vmatprep.subr.mxu0 0.0
    %118 = vmatpush1.msra.mxu0 %v87
    %119 = vmatprep.subr.mxu0 0.0
    %120 = vmatpush1.msra.mxu0 %v88
    %121 = vmatprep.subr.mxu0 0.0
    %122 = vmatpush1.msra.mxu0 0.0
    %123 = vmatprep.subr.mxu0 0.0
    %124 = vmatpush1.msra.mxu0 0.0
    %125 = vmatprep.subr.mxu0 0.0
    %126 = vmatpush1.msra.mxu0 0.0
    %127 = vmatprep.subr.mxu0 0.0
    %128 = vmatpush1.msra.mxu0 0.0
    %129 = vmatprep.subr.mxu0 0.0
    %130 = vmatpush1.msra.mxu0 0.0
    %131 = vmatprep.subr.mxu0 0.0
    %132 = vmatpush1.msra.mxu0 0.0
    %133 = vmatprep.subr.mxu0 0.0
    %134 = vmatpush1.msra.mxu0 0.0
    %135 = vmatprep.subr.mxu0 0.0
    %136 = vmatpush1.msra.mxu0 0.0
    %137 = vmatprep.subr.mxu0 0.0
    %138 = vmatpush1.msra.mxu0 0.0
    %139 = vmatprep.subr.mxu0 0.0
    %140 = vmatpush1.msra.mxu0 0.0
    %141 = vmatprep.subr.mxu0 0.0
    %142 = vmatpush1.msra.mxu0 0.0
    %143 = vmatprep.subr.mxu0 0.0
    %144 = vmatpush1.msra.mxu0 0.0
    %145 = vmatprep.subr.mxu0 0.0
    %146 = vmatpush1.msra.mxu0 0.0
    %147 = vmatprep.subr.mxu0 0.0
    %148 = vmatpush1.msra.mxu0 0.0
    %149 = vmatprep.subr.mxu0 0.0
    %150 = vmatpush1.msra.mxu0 0.0
    %151 = vmatprep.subr.mxu0 0.0
    %152 = vmatpush1.msra.mxu0 0.0
    %153 = vmatprep.mubr.f32.mxu0 0.0
    %154 = vmatmul.mubr.f32.gmra.mrb[0].mxu0 %v72
    %v155 = vpop.f32.mrb[0].mxu0
    %v156 = vadd.f32 0.0, %v155
    %v157 = vpop.f32.mrb[0].mxu0
    %158 = vdwg.mxu0
    %vm159 = vcmask 64512
    %v161 = vsel %vm159, %v70, 0
    %163 = vmatprep.subr.mxu0 0.0
    %164 = vmatpush1.msra.mxu0 %v71
    %165 = vmatprep.subr.mxu0 0.0
    %166 = vmatpush1.msra.mxu0 0.0
    %167 = vmatprep.subr.mxu0 0.0
    %168 = vmatpush1.msra.mxu0 0.0
    %169 = vmatprep.subr.mxu0 0.0
    %170 = vmatpush1.msra.mxu0 0.0
    %171 = vmatprep.subr.mxu0 0.0
    %172 = vmatpush1.msra.mxu0 0.0
    %173 = vmatprep.subr.mxu0 0.0
    %174 = vmatpush1.msra.mxu0 0.0
    %175 = vmatprep.subr.mxu0 0.0
    %176 = vmatpush1.msra.mxu0 0.0
    %177 = vmatprep.subr.mxu0 0.0
    %178 = vmatpush1.msra.mxu0 0.0
    %179 = vmatprep.subr.mxu0 0.0
    %180 = vmatpush1.msra.mxu0 0.0
    %181 = vmatprep.subr.mxu0 0.0
    %182 = vmatpush1.msra.mxu0 0.0
    %183 = vmatprep.subr.mxu0 0.0
    %184 = vmatpush1.msra.mxu0 0.0
    %185 = vmatprep.subr.mxu0 0.0
    %186 = vmatpush1.msra.mxu0 0.0
    %187 = vmatprep.subr.mxu0 0.0
    %188 = vmatpush1.msra.mxu0 0.0
    %189 = vmatprep.subr.mxu0 0.0
    %190 = vmatpush1.msra.mxu0 0.0
    %191 = vmatprep.subr.mxu0 0.0
    %192 = vmatpush1.msra.mxu0 0.0
    %193 = vmatprep.subr.mxu0 0.0
    %194 = vmatpush1.msra.mxu0 0.0
    %195 = vmatprep.subr.mxu0 0.0
    %196 = vmatpush1.msra.mxu0 0.0
    %197 = vmatprep.subr.mxu0 0.0
    %198 = vmatpush1.msra.mxu0 0.0
    %199 = vmatprep.subr.mxu0 0.0
    %200 = vmatpush1.msra.mxu0 0.0
    %201 = vmatprep.subr.mxu0 0.0
    %202 = vmatpush1.msra.mxu0 0.0
    %203 = vmatprep.subr.mxu0 0.0
    %204 = vmatpush1.msra.mxu0 0.0
    %205 = vmatprep.subr.mxu0 0.0
    %206 = vmatpush1.msra.mxu0 0.0
    %207 = vmatprep.subr.mxu0 0.0
    %208 = vmatpush1.msra.mxu0 0.0
    %209 = vmatprep.subr.mxu0 0.0
    %210 = vmatpush1.msra.mxu0 0.0
    %211 = vmatprep.subr.mxu0 0.0
    %212 = vmatpush1.msra.mxu0 0.0
    %213 = vmatprep.subr.mxu0 0.0
    %214 = vmatpush1.msra.mxu0 0.0
    %215 = vmatprep.subr.mxu0 0.0
    %216 = vmatpush1.msra.mxu0 0.0
    %217 = vmatprep.subr.mxu0 0.0
    %218 = vmatpush1.msra.mxu0 0.0
    %219 = vmatprep.subr.mxu0 0.0
    %220 = vmatpush1.msra.mxu0 0.0
    %221 = vmatprep.subr.mxu0 0.0
    %222 = vmatpush1.msra.mxu0 0.0
    %223 = vmatprep.subr.mxu0 0.0
    %224 = vmatpush1.msra.mxu0 0.0
    %225 = vmatprep.subr.mxu0 0.0
    %226 = vmatpush1.msra.mxu0 0.0
    %227 = vmatprep.mubr.f32.mxu0 0.0
    %228 = vmatmul.mubr.f32.gmra.mrb[0].mxu0 %v161
    %v229 = vpop.f32.mrb[0].mxu0
    %v230 = vadd.f32 %v156, %v229
    %v231 = vpop.f32.mrb[0].mxu0
    %232 = vdwg.mxu0
    %v233 = vld [vmem:[%s4] sm:$0x1]
    %v235 = vlaneseq
    %v236 = vshrl.u32 %v235, 7
    %v237 = vsub.s32 0, %v236
    %v238 = vrot.slane %v233, %v237
    %v240 = vadd.f32 %v230, %v238
    %v241 = vtanh.pop %v240
    %242 = vst [vmem:[#allocation10] sm:$0xff] %v241
    // Predicated region
    $region38: #{tpu_custom_call.1} parent=1 // pred_check
      _
    $region39: #{tpu_custom_call.1} parent=1 // pred_check_branch
      %244 = sbr.rel (0) target = $region41
    $region40: #{tpu_custom_call.1} parent=1 // pred_region
      %s246 = ssub.s32 128, 128
      %247 = vsyncadd [#allocation4], %s246
      %s249 = sshll.u32 [#allocation10], 4
      %s250 = int_to_ptr.vmem [resolvable:$true] %s249
      %252 = dma.vmem_to_hbm [thread:$0]  %s250, 128, %s5, [#allocation4]
    $region41: #{tpu_custom_call.1} parent=1 // pred_fallthru
      _
    // Predicated region
    $region42: #{tpu_custom_call.1} parent=1 // pred_check
      _
    $region43: #{tpu_custom_call.1} parent=1 // pred_check_branch
      %254 = sbr.rel (0) target = $region45
    $region44: #{tpu_custom_call.1} parent=1 // pred_region
      %255 = dma.done [#allocation4], 128
    $region45: #{tpu_custom_call.1} parent=1 // pred_fallthru
      _
    %256 = vsyncpa [#allocation3], 1
    %257 = vsyncpa [#allocation6], 1
    %258 = vsyncpa [#allocation9], 1
    %259 = vsyncpa [#allocation4], 1

</llo_original>
